<compile_context>
chip_gen: v6e
topology: v6e:2x2x1
jax: 0.10.0
libtpu: 0.0.40
codegen_flags: <defaults>
</compile_context>

<pallas_src>
import jax
import jax.numpy as jnp
from jax.experimental import pallas as pl
from jax.experimental.pallas import tpu as pltpu


# ----------------------------------------------------------------------------
# Pallas kernel: one (channel-tile, ROI-group) grid step.
#   feat_ref : (1, c_tile, D*H*W)          natural-order feature rows
#   w_ref    : (1, D*H*W, R*Pd*Ph*Pw)      fused per-group pooling weights
#   out_ref  : (1, c_tile, R*Pd*Ph*Pw)     lane-dense output slab
# Single MXU matmul, f32 accumulation, no epilogue.
# ----------------------------------------------------------------------------
def _roi_align3d_kernel(group_batch_ref, feat_ref, w_ref, out_ref):
    del group_batch_ref  # only consumed by the index_maps (scalar prefetch)
    out_ref[0] = jnp.dot(
        feat_ref[0], w_ref[0],
        preferred_element_type=jnp.float32).astype(out_ref.dtype)


# ----------------------------------------------------------------------------
# Per-axis interpolation weights (legacy aligned=False roi_align sampling:
# bin grid of `sampling_ratio` samples, linear interpolation, out-of-range
# samples zeroed, coordinates clamped to [0, size-1]).
# ----------------------------------------------------------------------------
def _axis_weights(lo, hi, pooled, size, sampling_ratio):
    g = int(sampling_ratio)
    roi_len = jnp.maximum(hi - lo, 1.0)
    bin_size = roi_len / float(pooled)                                # (K,)
    offs = (jnp.arange(pooled, dtype=jnp.float32)[:, None]
            + (jnp.arange(g, dtype=jnp.float32)[None, :] + 0.5) / g)  # (pooled, g)
    coord = lo[:, None, None] + offs[None] * bin_size[:, None, None]  # (K, pooled, g)
    valid = (coord >= -1.0) & (coord <= float(size))
    cc = jnp.clip(coord, 0.0, float(size - 1))
    low = jnp.floor(cc)
    high = jnp.minimum(low + 1.0, float(size - 1))
    frac = cc - low
    idx = jnp.arange(size, dtype=jnp.float32)
    w_low = (idx == low[..., None]).astype(jnp.float32) * (1.0 - frac)[..., None]
    w_high = (idx == high[..., None]).astype(jnp.float32) * frac[..., None]
    w = (w_low + w_high) * valid[..., None].astype(jnp.float32)       # (K, pooled, g, size)
    return w.sum(axis=2) / float(g)                                   # (K, pooled, size)


def _roi_weight_matrices(rois, output_size, spatial_scale, spatial_scale_depth,
                         D, H, W, sampling_ratio):
    Pd, Ph, Pw = output_size
    batch_idx = rois[:, 0].astype(jnp.int32)
    x1 = rois[:, 1] * spatial_scale
    y1 = rois[:, 2] * spatial_scale
    x2 = rois[:, 3] * spatial_scale
    y2 = rois[:, 4] * spatial_scale
    z1 = rois[:, 5] * spatial_scale_depth
    z2 = rois[:, 6] * spatial_scale_depth
    ww = _axis_weights(x1, x2, Pw, W, sampling_ratio)   # (K, Pw, W)
    wh = _axis_weights(y1, y2, Ph, H, sampling_ratio)   # (K, Ph, H)
    wd = _axis_weights(z1, z2, Pd, D, sampling_ratio)   # (K, Pd, D)
    return batch_idx, wd, wh, ww


# ----------------------------------------------------------------------------
# Hardware-aware sizing helpers.
# ----------------------------------------------------------------------------
def _vmem_capacity_bytes():
    """Physical VMEM per core; conservative 64 MiB (v7x) fallback."""
    try:
        cap = getattr(pltpu.get_tpu_info(), "vmem_capacity_bytes", None)
        if cap:
            return int(cap)
    except Exception:
        pass
    return 64 << 20


def _pick_roi_batch(pdphpw, dhw, w_itemsize, w_budget_bytes):
    """ROIs per grid step: aim for >=256 output lanes (multiple of 128),
    capped so the double-buffered weight block fits its VMEM budget."""
    lane_target = 256
    r = max(1, -(-lane_target // pdphpw))
    r0 = r
    while (r * pdphpw) % 128 != 0 and r * pdphpw < 2 * lane_target:
        r += 1
    if (r * pdphpw) % 128 != 0:
        r = r0
    while r > 1 and 2 * r * pdphpw * dhw * w_itemsize > w_budget_bytes:
        r -= 1
    return r


def _pick_channel_tile(C, dhw, itemsize, f_budget_bytes):
    """Largest channel tile whose DOUBLE-BUFFERED feature block fits the
    budget; multiples of 16 for bf16 (sublane packing), 8 otherwise, and
    rounded to 128/256 when large to feed full MXU tile heights."""
    step = 16 if itemsize == 2 else 8
    max_rows = (f_budget_bytes // 2) // max(dhw * itemsize, 1)
    if max_rows >= C:
        return C
    if max_rows >= 256:
        return (max_rows // 256) * 256
    if max_rows >= 128:
        return 128
    return max((max_rows // step) * step, step)


# ----------------------------------------------------------------------------
# Wrapper (equivalent of roi_align_forward_3d)
# ----------------------------------------------------------------------------
def roi_align_3d(feat, rois, output_size, spatial_scale, spatial_scale_depth,
                 sampling_ratio):
    assert sampling_ratio > 0, "only sampling_ratio > 0 is supported"
    N, C, D, H, W = feat.shape
    K = rois.shape[0]
    Pd, Ph, Pw = output_size
    DHW = D * H * W
    PdPhPw = Pd * Ph * Pw
    out_dtype = feat.dtype
    itemsize = jnp.dtype(out_dtype).itemsize

    # ---- hardware-aware VMEM budgets (v7x: 64 MiB, v5e/v6e: 128 MiB) ----
    vmem_cap = _vmem_capacity_bytes()
    budget = (vmem_cap * 3) // 4          # overall vmem_limit target
    w_budget = budget // 3                # double-buffered fused-weight blocks
    f_budget = budget // 3                # double-buffered feature blocks

    R = _pick_roi_batch(PdPhPw, DHW, itemsize, w_budget)
    c_tile = _pick_channel_tile(C, DHW, itemsize, f_budget)
    C_pad = -(-C // c_tile) * c_tile
    n_ct = C_pad // c_tile

    # ---- sort ROIs by batch index and pack into groups of R same-image ROIs
    batch_all = rois[:, 0].astype(jnp.int32)
    order = jnp.argsort(batch_all)
    inv_order = jnp.argsort(order)
    rois_s = rois[order]
    b_s = rois_s[:, 0].astype(jnp.int32)

    idx = jnp.arange(K, dtype=jnp.int32)
    is_start = jnp.concatenate(
        [jnp.array([True]), b_s[1:] != b_s[:-1]])                 # run starts
    run_start = jax.lax.cummax(jnp.where(is_start, idx, 0), axis=0)
    rank = idx - run_start                                        # rank in image
    new_group = is_start | (rank % R == 0)
    group_id = jnp.cumsum(new_group.astype(jnp.int32)) - 1        # (K,)
    slot = rank % R                                               # (K,)

    n_img = min(N, K)
    G = -(-(K + n_img * (R - 1)) // R)    # static upper bound on #groups
    group_batch = jnp.zeros((G,), jnp.int32).at[group_id].set(b_s)

    # ---- fused trilinear pooling weights, scattered into padded group slabs
    _, wd, wh, ww = _roi_weight_matrices(
        rois_s, output_size, spatial_scale, spatial_scale_depth, D, H, W,
        sampling_ratio)
    w_full = (jnp.einsum("kpd,kqh,krw->kdhwpqr", wd, wh, ww)
              .reshape(K, DHW, PdPhPw).astype(out_dtype))          # (K, DHW, PdPhPw)
    w_groups = jnp.zeros((G, DHW, R, PdPhPw), dtype=out_dtype)
    w_groups = w_groups.at[group_id, :, slot].set(w_full)          # pad slots stay 0
    w_groups = w_groups.reshape(G, DHW, R * PdPhPw)

    # ---- features: natural layout, channels zero-padded to a tile multiple
    feat_r = feat.reshape(N, C, DHW)
    if C_pad != C:
        feat_r = jnp.pad(feat_r, ((0, 0), (0, C_pad - C), (0, 0)))

    grid_spec = pltpu.PrefetchScalarGridSpec(
        num_scalar_prefetch=1,            # per-group batch indices -> SMEM
        grid=(n_ct, G),                   # group axis innermost -> feature reuse
        in_specs=[
            pl.BlockSpec((1, c_tile, DHW), lambda ci, g, gb: (gb[g], ci, 0)),
            pl.BlockSpec((1, DHW, R * PdPhPw), lambda ci, g, gb: (g, 0, 0)),
        ],
        out_specs=pl.BlockSpec((1, c_tile, R * PdPhPw),
                               lambda ci, g, gb: (g, ci, 0)),
    )

    # ---- explicit VMEM limit (double-buffered blocks + f32 intermediate),
    # capped by the generation's physical capacity.
    feat_blk = c_tile * DHW * itemsize
    w_blk = DHW * R * PdPhPw * itemsize
    out_blk = c_tile * R * PdPhPw * itemsize
    interm = c_tile * R * PdPhPw * 4
    needed = 2 * (feat_blk + w_blk + out_blk) + interm + (4 << 20)
    vmem_limit = int(max(min(needed, budget), min(32 << 20, budget)))

    flops = 2 * G * C_pad * DHW * R * PdPhPw
    bytes_accessed = (N * C_pad * DHW * itemsize      # ~one feature pass total
                      + n_ct * G * w_blk              # weights re-read per c-tile
                      + G * C_pad * R * PdPhPw * itemsize)

    out_p = pl.pallas_call(
        _roi_align3d_kernel,
        out_shape=jax.ShapeDtypeStruct((G, C_pad, R * PdPhPw), out_dtype),
        grid_spec=grid_spec,
        compiler_params=pltpu.CompilerParams(
            dimension_semantics=("parallel", "parallel"),
            vmem_limit_bytes=vmem_limit),
        cost_estimate=pl.CostEstimate(flops=int(flops), transcendentals=0,
                                      bytes_accessed=int(bytes_accessed)),
    )(group_batch, feat_r, w_groups)

    # ---- gather original ROI order directly from the padded group output
    out_r = out_p.reshape(G, C_pad, R, PdPhPw)
    out = out_r[group_id[inv_order], :, slot[inv_order]]   # (K, C_pad, PdPhPw)
    out = out[:, :C, :]
    return out.reshape(K, C, Pd, Ph, Pw)


def roi_align_3d_reference(feat, rois, output_size, spatial_scale,
                           spatial_scale_depth, sampling_ratio):
    """Pure-JAX reference for correctness checking."""
    N, C, D, H, W = feat.shape
    batch_idx, wd, wh, ww = _roi_weight_matrices(
        rois, output_size, spatial_scale, spatial_scale_depth, D, H, W,
        sampling_ratio)
    return jnp.einsum("kpd,kqh,krw,kcdhw->kcpqr", wd, wh, ww, feat[batch_idx])


class ROIAlign3D:
    """JAX/Pallas equivalent of the PyTorch ROIAlign3D module (forward only)."""

    def __init__(self, output_size, spatial_scale, spatial_scale_depth,
                 sampling_ratio):
        self.output_size = tuple(output_size)
        self.spatial_scale = float(spatial_scale)
        self.spatial_scale_depth = float(spatial_scale_depth)
        self.sampling_ratio = int(sampling_ratio)

    def __call__(self, input_tensor, rois):
        return roi_align_3d(input_tensor, rois, self.output_size,
                            self.spatial_scale, self.spatial_scale_depth,
                            self.sampling_ratio)

    def __repr__(self):
        return (f"{self.__class__.__name__}(output_size={self.output_size}, "
                f"spatial_scale={self.spatial_scale}, "
                f"spatial_scale_depth={self.spatial_scale_depth}, "
                f"sampling_ratio={self.sampling_ratio})")


if __name__ == "__main__":
    key = jax.random.PRNGKey(0)
    N, C, D, H, W = 2, 4, 4, 16, 16
    Pd, Ph, Pw = 2, 4, 4
    spatial_scale = 0.25          # H/W are 1/4 of original image resolution (64x64)
    spatial_scale_depth = 0.5     # D is 1/2 of original depth (8)
    sampling_ratio = 2

    kf, _ = jax.random.split(key)
    feat = jax.random.normal(kf, (N, C, D, H, W), dtype=jnp.float32)

    # rois: [batch_idx, x1, y1, x2, y2, z1, z2] in original (unscaled) coords,
    # deliberately batch-interleaved to exercise the sort/group/unsort path.
    rois = jnp.array(
        [
            [1.0, 10.0, 2.0, 34.0, 30.0, 0.0, 7.5],
            [0.0, 4.0, 6.0, 40.0, 52.0, 1.0, 6.0],
            [0.0, 0.0, 0.0, 62.0, 62.0, 0.0, 8.0],
        ],
        dtype=jnp.float32,
    )

    module = ROIAlign3D((Pd, Ph, Pw), spatial_scale, spatial_scale_depth,
                        sampling_ratio)
    out = jax.block_until_ready(module(feat, rois))

    ref = roi_align_3d_reference(feat, rois, (Pd, Ph, Pw), spatial_scale,
                                 spatial_scale_depth, sampling_ratio)
    assert out.shape == (rois.shape[0], C, Pd, Ph, Pw)
    err = float(jnp.max(jnp.abs(out - ref)))
    if err > 1e-4:
        raise AssertionError(f"Pallas ROIAlign3D mismatch vs reference: max|diff|={err}")

    print("KERNEL_OK")
</pallas_src>

<mosaic_0001>
module attributes {stable_mosaic.version = 11 : i64} {
  func.func @_roi_align3d_kernel(%arg0: i32, %arg1: i32, %arg2: memref<3xi32, #tpu.memory_space<smem>>, %arg3: memref<1x4x1024xf32, #tpu.memory_space<vmem>>, %arg4: memref<1x1024x256xf32, #tpu.memory_space<vmem>>, %arg5: memref<1x4x256xf32, #tpu.memory_space<vmem>>) attributes {dimension_semantics = [#tpu.dimension_semantics<parallel>, #tpu.dimension_semantics<parallel>], iteration_bounds = array<i64: 1, 3>, scalar_prefetch = 1 : i64, scratch_operands = 0 : i64, tpu.core_type = #tpu.core_type<tc>, window_params = [{transform_indices = @transform_0, window_bounds = array<i64: 1, 4, 1024>}, {transform_indices = @transform_1, window_bounds = array<i64: 1, 1024, 256>}, {transform_indices = @transform_2, window_bounds = array<i64: 1, 4, 256>}]} {
    %c0 = arith.constant 0 : index
    %c0_0 = arith.constant 0 : index
    %c0_1 = arith.constant 0 : index
    %0 = vector.load %arg3[%c0, %c0_0, %c0_1] : memref<1x4x1024xf32, #tpu.memory_space<vmem>>, vector<1x4x1024xf32>
    %1 = vector.shape_cast %0 : vector<1x4x1024xf32> to vector<4x1024xf32>
    %c0_2 = arith.constant 0 : index
    %c0_3 = arith.constant 0 : index
    %c0_4 = arith.constant 0 : index
    %2 = vector.load %arg4[%c0_2, %c0_3, %c0_4] : memref<1x1024x256xf32, #tpu.memory_space<vmem>>, vector<1x1024x256xf32>
    %3 = vector.shape_cast %2 : vector<1x1024x256xf32> to vector<1024x256xf32>
    %cst = arith.constant dense<0.000000e+00> : vector<4x256xf32>
    %4 = tpu.matmul %1, %3, %cst {dimension_numbers = #tpu.dot_dimension_numbers<[1], [0], [0], [1], [0, 0, 1, 1], [], []>} : vector<4x1024xf32>, vector<1024x256xf32>, vector<4x256xf32> -> vector<4x256xf32>
    %c0_5 = arith.constant 0 : index
    %c0_6 = arith.constant 0 : index
    %c0_7 = arith.constant 0 : index
    %5 = vector.load %arg5[%c0_5, %c0_6, %c0_7] : memref<1x4x256xf32, #tpu.memory_space<vmem>>, vector<1x4x256xf32>
    %6 = vector.shape_cast %5 : vector<1x4x256xf32> to vector<4x256xf32>
    %7 = vector.shape_cast %4 : vector<4x256xf32> to vector<1x4x256xf32>
    tpu.vector_store %arg5[%c0_5, %c0_6, %c0_7], %7 {strides = array<i32>} : memref<1x4x256xf32, #tpu.memory_space<vmem>>, vector<1x4x256xf32>,
    return
  }
  func.func @transform_0(%arg0: i32, %arg1: i32, %arg2: memref<3xi32, #tpu.memory_space<smem>>) -> (i32, i32, i32) {
    %0 = arith.index_cast %arg1 : i32 to index
    %1 = memref.load %arg2[%0] : memref<3xi32, #tpu.memory_space<smem>>
    %c0_i32 = arith.constant 0 : i32
    %c0_i32_0 = arith.constant 0 : i32
    return %1, %arg0, %c0_i32 : i32, i32, i32
  }
  func.func @transform_1(%arg0: i32, %arg1: i32, %arg2: memref<3xi32, #tpu.memory_space<smem>>) -> (i32, i32, i32) {
    %c0_i32 = arith.constant 0 : i32
    %c0_i32_0 = arith.constant 0 : i32
    %c0_i32_1 = arith.constant 0 : i32
    return %arg1, %c0_i32, %c0_i32_0 : i32, i32, i32
  }
  func.func @transform_2(%arg0: i32, %arg1: i32, %arg2: memref<3xi32, #tpu.memory_space<smem>>) -> (i32, i32, i32) {
    %c0_i32 = arith.constant 0 : i32
    %c0_i32_0 = arith.constant 0 : i32
    return %arg1, %arg0, %c0_i32 : i32, i32, i32
  }
}

</mosaic_0001>

<llo_original>
// kernel: tpu_custom_call.1
$region0: #{tpu_custom_call.1}
  #allocation0 [shape = 'u32[]', space=smem, size = 0x4, offset = 0x4, fixed_abs, tag = 'smem constant byte address 0x4 - core index']
  #allocation1 [shape = 'u32[144,128]{1,0:T(1,128)}', space=vmem, size = 0x12000, scoped, tag = 'internal scratch']
  #allocation2 [shape = 's32[1]{0}', space=sflag, size = 0x4, scoped, tag = 'scoped memory for tpu_custom_call.1']
  #allocation3 [shape = 'u8[512]{0}', space=smem, size = 0x200, scoped, tag = 'prefetched SMEM operand 0']
  %s0 = inlined_call_operand.hbm [shape: s32[3], index: 0, kind: input, shape index: {}]
  %s1 = inlined_call_operand.hbm [shape: f32[2,4,1024], index: 1, kind: input, shape index: {}]
  %s2 = inlined_call_operand.hbm [shape: f32[3,1024,256], index: 2, kind: input, shape index: {}]
  %s3 = inlined_call_operand.hbm [shape: f32[3,4,256], index: 3, kind: output, shape index: {}]
  %s4 = sld [smem:[#allocation0]]
  $region49: #{tpu_custom_call.1} parent=0
    _
  %s6 = ssub.s32 1, %s4
  %s7 = scalar_select 0, %s6, %s4
  %9 = dma.hbm_to_smem %s0, 16, [#allocation3], [#allocation2]
  %10 = dma.done [#allocation2], 16
  %11 = sfence
  $region1: #{tpu_custom_call.1} parent=0
    #allocation4 [shape = 'u8[32768]{0}', space=vmem, size = 0x8000, scoped, tag = 'input window, operand 1']
    #allocation5 [shape = 's32[2]{0}', space=sflag, size = 0x8, scoped, tag = 'scoped memory for tpu_custom_call.1']
    #allocation6 [shape = 's32[2]{0}', space=sflag, size = 0x8, scoped, tag = 'scoped memory for tpu_custom_call.1']
    #allocation7 [shape = 'u8[2097152]{0}', space=vmem, size = 0x200000, scoped, tag = 'input window, operand 2']
    #allocation8 [shape = 's32[2]{0}', space=sflag, size = 0x8, scoped, tag = 'scoped memory for tpu_custom_call.1']
    #allocation9 [shape = 'u8[8192]{0}', space=vmem, size = 0x2000, scoped, tag = 'output window, operand 0']
    %12 = vsyncpa [#allocation5], 0
    %s13 = scalar_lea.sflag [#allocation5], 1
    %14 = vsyncpa %s13, 0
    %15 = vsyncpa [#allocation8], 0
    %s16 = scalar_lea.sflag [#allocation8], 1
    %17 = vsyncpa %s16, 0
    %18 = vsyncpa [#allocation6], 0
    %s19 = scalar_lea.sflag [#allocation6], 1
    %20 = vsyncpa %s19, 0
    loop: start=0, step=1, limit=5
    $region2: #{tpu_custom_call.1} parent=1 // loop_pre_header
      _
    $region3: #{tpu_custom_call.1} parent=1 // loop_header
      %s22 = sphi 0, %s26
      %p23 = scmp.ge.s32.totalorder %s22, 5
      %s29 = sphi 0, %s41
      %s30 = sphi 0, %s37
      %s31 = sphi 0, %s29
      %s32 = sphi 0, %s30
      %s33 = sphi 0, %s31
      %s34 = sphi 0, %s32
      %s48 = sphi 0, %s50
      %s51 = sphi 0, %s48
      %s52 = sphi 0, %s51
      %s68 = sphi 0, %s52
      %s74 = sphi 0, %s76
      %s77 = sphi 0, %s74
      %s78 = sphi 0, %s77
      %s94 = sphi 0, %s78
      %s102 = sphi 0, %s104
      %s105 = sphi 0, %s102
      %s106 = sphi 0, %s105
      %s122 = sphi 0, %s106
    $region4: #{tpu_custom_call.1} parent=1 // loop_header_branch
      %25 = sbr.rel (%p23) target = $region8
    $region5: #{tpu_custom_call.1} parent=1 // loop_body
      %s27 = ssub.s32 %s22, 1
      %s28 = ssub.s32 %s22, 2
      %s35 = sadd.s32 1, %s30
      %p36 = scmp.ge.s32.totalorder %s35, 3
      %s37 = scalar_select %p36, 0, %s35
      %s38 = sadd.s32 1, %s29
      %s39 = scalar_select %p36, %s38, %s29
      %p40 = scmp.ge.s32.totalorder %s39, 1
      %s41 = scalar_select %p40, 0, %s39
      %s42 = sld [smem:[#allocation3 + %s30]]
      %s43 = sld [smem:[#allocation3 + %s37]]
      %s44 = ssub.s32 %s42, %s43
      %s45 = ssub.s32 %s29, %s41
      %s46 = sor.u32 %s44, %s45
      %p47 = scmp.eq.s32.totalorder %s46, 0
      %s49 = sadd.s32 %s48, 1
      %s50 = scalar_select %p47, %s48, %s49
      %p53 = pneg %p47
      %p54 = scmp.eq.s32.totalorder %s22, 2
      %p55 = por %p53, %p54
      %p56 = scmp.ne.s32.totalorder %s48, %s51
      %p57 = scmp.eq.s32.totalorder %s22, 0
      %p58 = por %p56, %p57
      %p59 = scmp.ne.s32.totalorder %s48, %s51
      %p60 = scmp.eq.s32.totalorder %s27, 2
      %p61 = por %p59, %p60
      %p62 = scmp.ne.s32.totalorder %s51, %s52
      %p63 = scmp.eq.s32.totalorder %s27, 0
      %p64 = por %p62, %p63
      %p65 = scmp.ne.s32.totalorder %s51, %s52
      %p66 = scmp.eq.s32.totalorder %s28, 2
      %p67 = por %p65, %p66
      %p69 = scmp.ne.s32.totalorder %s52, %s68
      %p70 = scmp.eq.s32.totalorder %s28, 0
      %p71 = por %p69, %p70
      %s72 = ssub.s32 %s30, %s37
      %p73 = scmp.eq.s32.totalorder %s72, 0
      %s75 = sadd.s32 %s74, 1
      %s76 = scalar_select %p73, %s74, %s75
      %p79 = pneg %p73
      %p80 = scmp.eq.s32.totalorder %s22, 2
      %p81 = por %p79, %p80
      %p82 = scmp.ne.s32.totalorder %s74, %s77
      %p83 = scmp.eq.s32.totalorder %s22, 0
      %p84 = por %p82, %p83
      %p85 = scmp.ne.s32.totalorder %s74, %s77
      %p86 = scmp.eq.s32.totalorder %s27, 2
      %p87 = por %p85, %p86
      %p88 = scmp.ne.s32.totalorder %s77, %s78
      %p89 = scmp.eq.s32.totalorder %s27, 0
      %p90 = por %p88, %p89
      %p91 = scmp.ne.s32.totalorder %s77, %s78
      %p92 = scmp.eq.s32.totalorder %s28, 2
      %p93 = por %p91, %p92
      %p95 = scmp.ne.s32.totalorder %s78, %s94
      %p96 = scmp.eq.s32.totalorder %s28, 0
      %p97 = por %p95, %p96
      %s98 = ssub.s32 %s30, %s37
      %s99 = ssub.s32 %s29, %s41
      %s100 = sor.u32 %s98, %s99
      %p101 = scmp.eq.s32.totalorder %s100, 0
      %s103 = sadd.s32 %s102, 1
      %s104 = scalar_select %p101, %s102, %s103
      %p107 = pneg %p101
      %p108 = scmp.eq.s32.totalorder %s22, 2
      %p109 = por %p107, %p108
      %p110 = scmp.ne.s32.totalorder %s102, %s105
      %p111 = scmp.eq.s32.totalorder %s22, 0
      %p112 = por %p110, %p111
      %p113 = scmp.ne.s32.totalorder %s102, %s105
      %p114 = scmp.eq.s32.totalorder %s27, 2
      %p115 = por %p113, %p114
      %p116 = scmp.ne.s32.totalorder %s105, %s106
      %p117 = scmp.eq.s32.totalorder %s27, 0
      %p118 = por %p116, %p117
      %p119 = scmp.ne.s32.totalorder %s105, %s106
      %p120 = scmp.eq.s32.totalorder %s28, 2
      %p121 = por %p119, %p120
      %p123 = scmp.ne.s32.totalorder %s106, %s122
      %p124 = scmp.eq.s32.totalorder %s28, 0
      %p125 = por %p123, %p124
      %p126 = scmp.le.s32.totalorder 1, %s22
      %p127 = scmp.lt.s32.totalorder %s22, 4
      %p128 = pnand %p126, %p127
      %p129 = pneg %p128
      // Predicated region
      $region9: #{tpu_custom_call.1} parent=5 // pred_check
        _
      $region10: #{tpu_custom_call.1} parent=5 // pred_check_branch
        %131 = sbr.rel (%p128) target = $region12
      $region11: #{tpu_custom_call.1} parent=5 // pred_region
        %s132 = ssub.s32 %s22, 1
      $region12: #{tpu_custom_call.1} parent=5 // pred_fallthru
        _
      %p133 = scmp.lt.s32.totalorder %s22, 3
      // Predicated region
      $region13: #{tpu_custom_call.1} parent=5 // pred_check
        %p134 = pneg %p133
      $region14: #{tpu_custom_call.1} parent=5 // pred_check_branch
        %136 = sbr.rel (%p134) target = $region16
      $region15: #{tpu_custom_call.1} parent=5 // pred_region
        // Predicated region
        $region17: #{tpu_custom_call.1} parent=15 // pred_check
          %p137 = pneg %p58
        $region18: #{tpu_custom_call.1} parent=15 // pred_check_branch
          %139 = sbr.rel (%p137) target = $region20
        $region19: #{tpu_custom_call.1} parent=15 // pred_region
          %s140 = sand.u32 %s48, 1
          %s141 = scalar_lea.sflag [#allocation5], %s140
          %s142 = sand.u32 %s48, 1
          %s143 = smul.addr %s142, 32
          %s144 = scalar_lea.vmem [#allocation4], %s143
          %s145 = sld [smem:[#allocation3 + %s30]]
          %s147 = ssub.s32 512, 512
          %148 = vsyncadd %s141, %s147
          %s149 = smul.addr %s29, 8
          %s150 = smul.addr %s145, 8
          %s151 = sadd.s32 %s149, %s150
          %s152 = smul.addr %s151, 64
          %s153 = scalar_lea.hbm %s1, %s152
          %s155 = sshll.u32 %s144, 4
          %s156 = int_to_ptr.vmem [resolvable:$true] %s155
          %158 = dma.hbm_to_vmem [thread:$0]  %s153, 512, %s156, %s141
        $region20: #{tpu_custom_call.1} parent=15 // pred_fallthru
          _
        // Predicated region
        $region21: #{tpu_custom_call.1} parent=15 // pred_check
          %p159 = pneg %p84
        $region22: #{tpu_custom_call.1} parent=15 // pred_check_branch
          %161 = sbr.rel (%p159) target = $region24
        $region23: #{tpu_custom_call.1} parent=15 // pred_region
          %s162 = sand.u32 %s74, 1
          %s163 = scalar_lea.sflag [#allocation8], %s162
          %s164 = sand.u32 %s74, 1
          %s165 = smul.addr %s164, 2048
          %s166 = scalar_lea.vmem [#allocation7], %s165
          %s168 = ssub.s32 32768, 32768
          %169 = vsyncadd %s163, %s168
          %s170 = smul.addr %s30, 256
          %s171 = smul.addr %s170, 128
          %s172 = scalar_lea.hbm %s2, %s171
          %s173 = sshll.u32 %s166, 4
          %s174 = int_to_ptr.vmem [resolvable:$true] %s173
          %179 = dma.hbm_to_vmem [thread:$0]  %s172, 32768, %s174, %s163, 256, 256, 16
        $region24: #{tpu_custom_call.1} parent=15 // pred_fallthru
          _
      $region16: #{tpu_custom_call.1} parent=5 // pred_fallthru
        _
      %p180 = scmp.le.s32.totalorder 1, %s22
      %p181 = scmp.lt.s32.totalorder %s22, 4
      %p182 = pnand %p180, %p181
      %p183 = pneg %p182
      // Predicated region
      $region25: #{tpu_custom_call.1} parent=5 // pred_check
        _
      $region26: #{tpu_custom_call.1} parent=5 // pred_check_branch
        %185 = sbr.rel (%p182) target = $region28
      $region27: #{tpu_custom_call.1} parent=5 // pred_region
        %s186 = ssub.s32 %s22, 1
        %s187 = sand.u32 %s51, 1
        %s188 = scalar_lea.sflag [#allocation5], %s187
        %s189 = sand.u32 %s51, 1
        %s190 = smul.addr %s189, 32
        %s191 = scalar_lea.vmem [#allocation4], %s190
        // Predicated region
        $region29: #{tpu_custom_call.1} parent=27 // pred_check
          %p192 = pneg %p64
        $region30: #{tpu_custom_call.1} parent=27 // pred_check_branch
          %194 = sbr.rel (%p192) target = $region32
        $region31: #{tpu_custom_call.1} parent=27 // pred_region
          %195 = dma.done %s188, 512
        $region32: #{tpu_custom_call.1} parent=27 // pred_fallthru
          _
        %s196 = sand.u32 %s77, 1
        %s197 = scalar_lea.sflag [#allocation8], %s196
        %s198 = sand.u32 %s77, 1
        %s199 = smul.addr %s198, 2048
        %s200 = scalar_lea.vmem [#allocation7], %s199
        // Predicated region
        $region33: #{tpu_custom_call.1} parent=27 // pred_check
          %p201 = pneg %p90
        $region34: #{tpu_custom_call.1} parent=27 // pred_check_branch
          %203 = sbr.rel (%p201) target = $region36
        $region35: #{tpu_custom_call.1} parent=27 // pred_region
          %204 = dma.done %s197, 32768
        $region36: #{tpu_custom_call.1} parent=27 // pred_fallthru
          _
        %s205 = sand.u32 %s51, 1
        %s206 = scalar_lea.sflag [#allocation5], %s205
        %s207 = sand.u32 %s51, 1
        %s208 = smul.addr %s207, 32
        %s209 = scalar_lea.vmem [#allocation4], %s208
        %p210 = pneg %p64
        %p211 = pneg %p61
        %s212 = sand.u32 %s77, 1
        %s213 = scalar_lea.sflag [#allocation8], %s212
        %s214 = sand.u32 %s77, 1
        %s215 = smul.addr %s214, 2048
        %s216 = scalar_lea.vmem [#allocation7], %s215
        %p217 = pneg %p90
        %p218 = pneg %p87
        %p219 = pneg %p118
        %p220 = pneg %p115
        %s221 = sand.u32 %s105, 1
        %s222 = scalar_lea.sflag [#allocation6], %s221
        %s223 = sand.u32 %s105, 1
        %s224 = smul.addr %s223, 8
        %s225 = scalar_lea.vmem [#allocation9], %s224
        %s226 = sld [smem:[#allocation3 + %s32]]
        %v227 = vld [vmem:[%s191] sm:$0xff]
        %v228 = vld [vmem:[%s191 + $0x8] sm:$0xff]
        %v229 = vld [vmem:[%s191 + $0x10] sm:$0xff]
        %v230 = vld [vmem:[%s191 + $0x18] sm:$0xff]
        %v231 = vld [vmem:[%s200] sm:$0xff]
        %v232 = vld [vmem:[%s200 + $0x8] sm:$0xff]
        %v233 = vld [vmem:[%s200 + $0x10] sm:$0xff]
        %v234 = vld [vmem:[%s200 + $0x18] sm:$0xff]
        %v235 = vld [vmem:[%s200 + $0x20] sm:$0xff]
        %v236 = vld [vmem:[%s200 + $0x28] sm:$0xff]
        %v237 = vld [vmem:[%s200 + $0x30] sm:$0xff]
        %v238 = vld [vmem:[%s200 + $0x38] sm:$0xff]
        %v239 = vld [vmem:[%s200 + $0x40] sm:$0xff]
        %v240 = vld [vmem:[%s200 + $0x48] sm:$0xff]
        %v241 = vld [vmem:[%s200 + $0x50] sm:$0xff]
        %v242 = vld [vmem:[%s200 + $0x58] sm:$0xff]
        %v243 = vld [vmem:[%s200 + $0x60] sm:$0xff]
        %v244 = vld [vmem:[%s200 + $0x68] sm:$0xff]
        %v245 = vld [vmem:[%s200 + $0x70] sm:$0xff]
        %v246 = vld [vmem:[%s200 + $0x78] sm:$0xff]
        %v247 = vld [vmem:[%s200 + $0x80] sm:$0xff]
        %v248 = vld [vmem:[%s200 + $0x88] sm:$0xff]
        %v249 = vld [vmem:[%s200 + $0x90] sm:$0xff]
        %v250 = vld [vmem:[%s200 + $0x98] sm:$0xff]
        %v251 = vld [vmem:[%s200 + $0xa0] sm:$0xff]
        %v252 = vld [vmem:[%s200 + $0xa8] sm:$0xff]
        %v253 = vld [vmem:[%s200 + $0xb0] sm:$0xff]
        %v254 = vld [vmem:[%s200 + $0xb8] sm:$0xff]
        %v255 = vld [vmem:[%s200 + $0xc0] sm:$0xff]
        %v256 = vld [vmem:[%s200 + $0xc8] sm:$0xff]
        %v257 = vld [vmem:[%s200 + $0xd0] sm:$0xff]
        %v258 = vld [vmem:[%s200 + $0xd8] sm:$0xff]
        %v259 = vld [vmem:[%s200 + $0xe0] sm:$0xff]
        %v260 = vld [vmem:[%s200 + $0xe8] sm:$0xff]
        %v261 = vld [vmem:[%s200 + $0xf0] sm:$0xff]
        %v262 = vld [vmem:[%s200 + $0xf8] sm:$0xff]
        %v263 = vld [vmem:[%s200 + $0x100] sm:$0xff]
        %v264 = vld [vmem:[%s200 + $0x108] sm:$0xff]
        %v265 = vld [vmem:[%s200 + $0x110] sm:$0xff]
        %v266 = vld [vmem:[%s200 + $0x118] sm:$0xff]
        %v267 = vld [vmem:[%s200 + $0x120] sm:$0xff]
        %v268 = vld [vmem:[%s200 + $0x128] sm:$0xff]
        %v269 = vld [vmem:[%s200 + $0x130] sm:$0xff]
        %v270 = vld [vmem:[%s200 + $0x138] sm:$0xff]
        %v271 = vld [vmem:[%s200 + $0x140] sm:$0xff]
        %v272 = vld [vmem:[%s200 + $0x148] sm:$0xff]
        %v273 = vld [vmem:[%s200 + $0x150] sm:$0xff]
        %v274 = vld [vmem:[%s200 + $0x158] sm:$0xff]
        %v275 = vld [vmem:[%s200 + $0x160] sm:$0xff]
        %v276 = vld [vmem:[%s200 + $0x168] sm:$0xff]
        %v277 = vld [vmem:[%s200 + $0x170] sm:$0xff]
        %v278 = vld [vmem:[%s200 + $0x178] sm:$0xff]
        %v279 = vld [vmem:[%s200 + $0x180] sm:$0xff]
        %v280 = vld [vmem:[%s200 + $0x188] sm:$0xff]
        %v281 = vld [vmem:[%s200 + $0x190] sm:$0xff]
        %v282 = vld [vmem:[%s200 + $0x198] sm:$0xff]
        %v283 = vld [vmem:[%s200 + $0x1a0] sm:$0xff]
        %v284 = vld [vmem:[%s200 + $0x1a8] sm:$0xff]
        %v285 = vld [vmem:[%s200 + $0x1b0] sm:$0xff]
        %v286 = vld [vmem:[%s200 + $0x1b8] sm:$0xff]
        %v287 = vld [vmem:[%s200 + $0x1c0] sm:$0xff]
        %v288 = vld [vmem:[%s200 + $0x1c8] sm:$0xff]
        %v289 = vld [vmem:[%s200 + $0x1d0] sm:$0xff]
        %v290 = vld [vmem:[%s200 + $0x1d8] sm:$0xff]
        %v291 = vld [vmem:[%s200 + $0x1e0] sm:$0xff]
        %v292 = vld [vmem:[%s200 + $0x1e8] sm:$0xff]
        %v293 = vld [vmem:[%s200 + $0x1f0] sm:$0xff]
        %v294 = vld [vmem:[%s200 + $0x1f8] sm:$0xff]
        %v295 = vld [vmem:[%s200 + $0x200] sm:$0xff]
        %v296 = vld [vmem:[%s200 + $0x208] sm:$0xff]
        %v297 = vld [vmem:[%s200 + $0x210] sm:$0xff]
        %v298 = vld [vmem:[%s200 + $0x218] sm:$0xff]
        %v299 = vld [vmem:[%s200 + $0x220] sm:$0xff]
        %v300 = vld [vmem:[%s200 + $0x228] sm:$0xff]
        %v301 = vld [vmem:[%s200 + $0x230] sm:$0xff]
        %v302 = vld [vmem:[%s200 + $0x238] sm:$0xff]
        %v303 = vld [vmem:[%s200 + $0x240] sm:$0xff]
        %v304 = vld [vmem:[%s200 + $0x248] sm:$0xff]
        %v305 = vld [vmem:[%s200 + $0x250] sm:$0xff]
        %v306 = vld [vmem:[%s200 + $0x258] sm:$0xff]
        %v307 = vld [vmem:[%s200 + $0x260] sm:$0xff]
        %v308 = vld [vmem:[%s200 + $0x268] sm:$0xff]
        %v309 = vld [vmem:[%s200 + $0x270] sm:$0xff]
        %v310 = vld [vmem:[%s200 + $0x278] sm:$0xff]
        %v311 = vld [vmem:[%s200 + $0x280] sm:$0xff]
        %v312 = vld [vmem:[%s200 + $0x288] sm:$0xff]
        %v313 = vld [vmem:[%s200 + $0x290] sm:$0xff]
        %v314 = vld [vmem:[%s200 + $0x298] sm:$0xff]
        %v315 = vld [vmem:[%s200 + $0x2a0] sm:$0xff]
        %v316 = vld [vmem:[%s200 + $0x2a8] sm:$0xff]
        %v317 = vld [vmem:[%s200 + $0x2b0] sm:$0xff]
        %v318 = vld [vmem:[%s200 + $0x2b8] sm:$0xff]
        %v319 = vld [vmem:[%s200 + $0x2c0] sm:$0xff]
        %v320 = vld [vmem:[%s200 + $0x2c8] sm:$0xff]
        %v321 = vld [vmem:[%s200 + $0x2d0] sm:$0xff]
        %v322 = vld [vmem:[%s200 + $0x2d8] sm:$0xff]
        %v323 = vld [vmem:[%s200 + $0x2e0] sm:$0xff]
        %v324 = vld [vmem:[%s200 + $0x2e8] sm:$0xff]
        %v325 = vld [vmem:[%s200 + $0x2f0] sm:$0xff]
        %v326 = vld [vmem:[%s200 + $0x2f8] sm:$0xff]
        %v327 = vld [vmem:[%s200 + $0x300] sm:$0xff]
        %v328 = vld [vmem:[%s200 + $0x308] sm:$0xff]
        %v329 = vld [vmem:[%s200 + $0x310] sm:$0xff]
        %v330 = vld [vmem:[%s200 + $0x318] sm:$0xff]
        %v331 = vld [vmem:[%s200 + $0x320] sm:$0xff]
        %v332 = vld [vmem:[%s200 + $0x328] sm:$0xff]
        %v333 = vld [vmem:[%s200 + $0x330] sm:$0xff]
        %v334 = vld [vmem:[%s200 + $0x338] sm:$0xff]
        %v335 = vld [vmem:[%s200 + $0x340] sm:$0xff]
        %v336 = vld [vmem:[%s200 + $0x348] sm:$0xff]
        %v337 = vld [vmem:[%s200 + $0x350] sm:$0xff]
        %v338 = vld [vmem:[%s200 + $0x358] sm:$0xff]
        %v339 = vld [vmem:[%s200 + $0x360] sm:$0xff]
        %v340 = vld [vmem:[%s200 + $0x368] sm:$0xff]
        %v341 = vld [vmem:[%s200 + $0x370] sm:$0xff]
        %v342 = vld [vmem:[%s200 + $0x378] sm:$0xff]
        %v343 = vld [vmem:[%s200 + $0x380] sm:$0xff]
        %v344 = vld [vmem:[%s200 + $0x388] sm:$0xff]
        %v345 = vld [vmem:[%s200 + $0x390] sm:$0xff]
        %v346 = vld [vmem:[%s200 + $0x398] sm:$0xff]
        %v347 = vld [vmem:[%s200 + $0x3a0] sm:$0xff]
        %v348 = vld [vmem:[%s200 + $0x3a8] sm:$0xff]
        %v349 = vld [vmem:[%s200 + $0x3b0] sm:$0xff]
        %v350 = vld [vmem:[%s200 + $0x3b8] sm:$0xff]
        %v351 = vld [vmem:[%s200 + $0x3c0] sm:$0xff]
        %v352 = vld [vmem:[%s200 + $0x3c8] sm:$0xff]
        %v353 = vld [vmem:[%s200 + $0x3d0] sm:$0xff]
        %v354 = vld [vmem:[%s200 + $0x3d8] sm:$0xff]
        %v355 = vld [vmem:[%s200 + $0x3e0] sm:$0xff]
        %v356 = vld [vmem:[%s200 + $0x3e8] sm:$0xff]
        %v357 = vld [vmem:[%s200 + $0x3f0] sm:$0xff]
        %v358 = vld [vmem:[%s200 + $0x3f8] sm:$0xff]
        %v359 = vld [vmem:[%s200 + $0x400] sm:$0xff]
        %v360 = vld [vmem:[%s200 + $0x408] sm:$0xff]
        %v361 = vld [vmem:[%s200 + $0x410] sm:$0xff]
        %v362 = vld [vmem:[%s200 + $0x418] sm:$0xff]
        %v363 = vld [vmem:[%s200 + $0x420] sm:$0xff]
        %v364 = vld [vmem:[%s200 + $0x428] sm:$0xff]
        %v365 = vld [vmem:[%s200 + $0x430] sm:$0xff]
        %v366 = vld [vmem:[%s200 + $0x438] sm:$0xff]
        %v367 = vld [vmem:[%s200 + $0x440] sm:$0xff]
        %v368 = vld [vmem:[%s200 + $0x448] sm:$0xff]
        %v369 = vld [vmem:[%s200 + $0x450] sm:$0xff]
        %v370 = vld [vmem:[%s200 + $0x458] sm:$0xff]
        %v371 = vld [vmem:[%s200 + $0x460] sm:$0xff]
        %v372 = vld [vmem:[%s200 + $0x468] sm:$0xff]
        %v373 = vld [vmem:[%s200 + $0x470] sm:$0xff]
        %v374 = vld [vmem:[%s200 + $0x478] sm:$0xff]
        %v375 = vld [vmem:[%s200 + $0x480] sm:$0xff]
        %v376 = vld [vmem:[%s200 + $0x488] sm:$0xff]
        %v377 = vld [vmem:[%s200 + $0x490] sm:$0xff]
        %v378 = vld [vmem:[%s200 + $0x498] sm:$0xff]
        %v379 = vld [vmem:[%s200 + $0x4a0] sm:$0xff]
        %v380 = vld [vmem:[%s200 + $0x4a8] sm:$0xff]
        %v381 = vld [vmem:[%s200 + $0x4b0] sm:$0xff]
        %v382 = vld [vmem:[%s200 + $0x4b8] sm:$0xff]
        %v383 = vld [vmem:[%s200 + $0x4c0] sm:$0xff]
        %v384 = vld [vmem:[%s200 + $0x4c8] sm:$0xff]
        %v385 = vld [vmem:[%s200 + $0x4d0] sm:$0xff]
        %v386 = vld [vmem:[%s200 + $0x4d8] sm:$0xff]
        %v387 = vld [vmem:[%s200 + $0x4e0] sm:$0xff]
        %v388 = vld [vmem:[%s200 + $0x4e8] sm:$0xff]
        %v389 = vld [vmem:[%s200 + $0x4f0] sm:$0xff]
        %v390 = vld [vmem:[%s200 + $0x4f8] sm:$0xff]
        %v391 = vld [vmem:[%s200 + $0x500] sm:$0xff]
        %v392 = vld [vmem:[%s200 + $0x508] sm:$0xff]
        %v393 = vld [vmem:[%s200 + $0x510] sm:$0xff]
        %v394 = vld [vmem:[%s200 + $0x518] sm:$0xff]
        %v395 = vld [vmem:[%s200 + $0x520] sm:$0xff]
        %v396 = vld [vmem:[%s200 + $0x528] sm:$0xff]
        %v397 = vld [vmem:[%s200 + $0x530] sm:$0xff]
        %v398 = vld [vmem:[%s200 + $0x538] sm:$0xff]
        %v399 = vld [vmem:[%s200 + $0x540] sm:$0xff]
        %v400 = vld [vmem:[%s200 + $0x548] sm:$0xff]
        %v401 = vld [vmem:[%s200 + $0x550] sm:$0xff]
        %v402 = vld [vmem:[%s200 + $0x558] sm:$0xff]
        %v403 = vld [vmem:[%s200 + $0x560] sm:$0xff]
        %v404 = vld [vmem:[%s200 + $0x568] sm:$0xff]
        %v405 = vld [vmem:[%s200 + $0x570] sm:$0xff]
        %v406 = vld [vmem:[%s200 + $0x578] sm:$0xff]
        %v407 = vld [vmem:[%s200 + $0x580] sm:$0xff]
        %v408 = vld [vmem:[%s200 + $0x588] sm:$0xff]
        %v409 = vld [vmem:[%s200 + $0x590] sm:$0xff]
        %v410 = vld [vmem:[%s200 + $0x598] sm:$0xff]
        %v411 = vld [vmem:[%s200 + $0x5a0] sm:$0xff]
        %v412 = vld [vmem:[%s200 + $0x5a8] sm:$0xff]
        %v413 = vld [vmem:[%s200 + $0x5b0] sm:$0xff]
        %v414 = vld [vmem:[%s200 + $0x5b8] sm:$0xff]
        %v415 = vld [vmem:[%s200 + $0x5c0] sm:$0xff]
        %v416 = vld [vmem:[%s200 + $0x5c8] sm:$0xff]
        %v417 = vld [vmem:[%s200 + $0x5d0] sm:$0xff]
        %v418 = vld [vmem:[%s200 + $0x5d8] sm:$0xff]
        %v419 = vld [vmem:[%s200 + $0x5e0] sm:$0xff]
        %v420 = vld [vmem:[%s200 + $0x5e8] sm:$0xff]
        %v421 = vld [vmem:[%s200 + $0x5f0] sm:$0xff]
        %v422 = vld [vmem:[%s200 + $0x5f8] sm:$0xff]
        %v423 = vld [vmem:[%s200 + $0x600] sm:$0xff]
        %v424 = vld [vmem:[%s200 + $0x608] sm:$0xff]
        %v425 = vld [vmem:[%s200 + $0x610] sm:$0xff]
        %v426 = vld [vmem:[%s200 + $0x618] sm:$0xff]
        %v427 = vld [vmem:[%s200 + $0x620] sm:$0xff]
        %v428 = vld [vmem:[%s200 + $0x628] sm:$0xff]
        %v429 = vld [vmem:[%s200 + $0x630] sm:$0xff]
        %v430 = vld [vmem:[%s200 + $0x638] sm:$0xff]
        %v431 = vld [vmem:[%s200 + $0x640] sm:$0xff]
        %v432 = vld [vmem:[%s200 + $0x648] sm:$0xff]
        %v433 = vld [vmem:[%s200 + $0x650] sm:$0xff]
        %v434 = vld [vmem:[%s200 + $0x658] sm:$0xff]
        %v435 = vld [vmem:[%s200 + $0x660] sm:$0xff]
        %v436 = vld [vmem:[%s200 + $0x668] sm:$0xff]
        %v437 = vld [vmem:[%s200 + $0x670] sm:$0xff]
        %v438 = vld [vmem:[%s200 + $0x678] sm:$0xff]
        %v439 = vld [vmem:[%s200 + $0x680] sm:$0xff]
        %v440 = vld [vmem:[%s200 + $0x688] sm:$0xff]
        %v441 = vld [vmem:[%s200 + $0x690] sm:$0xff]
        %v442 = vld [vmem:[%s200 + $0x698] sm:$0xff]
        %v443 = vld [vmem:[%s200 + $0x6a0] sm:$0xff]
        %v444 = vld [vmem:[%s200 + $0x6a8] sm:$0xff]
        %v445 = vld [vmem:[%s200 + $0x6b0] sm:$0xff]
        %v446 = vld [vmem:[%s200 + $0x6b8] sm:$0xff]
        %v447 = vld [vmem:[%s200 + $0x6c0] sm:$0xff]
        %v448 = vld [vmem:[%s200 + $0x6c8] sm:$0xff]
        %v449 = vld [vmem:[%s200 + $0x6d0] sm:$0xff]
        %v450 = vld [vmem:[%s200 + $0x6d8] sm:$0xff]
        %v451 = vld [vmem:[%s200 + $0x6e0] sm:$0xff]
        %v452 = vld [vmem:[%s200 + $0x6e8] sm:$0xff]
        %v453 = vld [vmem:[%s200 + $0x6f0] sm:$0xff]
        %v454 = vld [vmem:[%s200 + $0x6f8] sm:$0xff]
        %v455 = vld [vmem:[%s200 + $0x700] sm:$0xff]
        %v456 = vld [vmem:[%s200 + $0x708] sm:$0xff]
        %v457 = vld [vmem:[%s200 + $0x710] sm:$0xff]
        %v458 = vld [vmem:[%s200 + $0x718] sm:$0xff]
        %v459 = vld [vmem:[%s200 + $0x720] sm:$0xff]
        %v460 = vld [vmem:[%s200 + $0x728] sm:$0xff]
        %v461 = vld [vmem:[%s200 + $0x730] sm:$0xff]
        %v462 = vld [vmem:[%s200 + $0x738] sm:$0xff]
        %v463 = vld [vmem:[%s200 + $0x740] sm:$0xff]
        %v464 = vld [vmem:[%s200 + $0x748] sm:$0xff]
        %v465 = vld [vmem:[%s200 + $0x750] sm:$0xff]
        %v466 = vld [vmem:[%s200 + $0x758] sm:$0xff]
        %v467 = vld [vmem:[%s200 + $0x760] sm:$0xff]
        %v468 = vld [vmem:[%s200 + $0x768] sm:$0xff]
        %v469 = vld [vmem:[%s200 + $0x770] sm:$0xff]
        %v470 = vld [vmem:[%s200 + $0x778] sm:$0xff]
        %v471 = vld [vmem:[%s200 + $0x780] sm:$0xff]
        %v472 = vld [vmem:[%s200 + $0x788] sm:$0xff]
        %v473 = vld [vmem:[%s200 + $0x790] sm:$0xff]
        %v474 = vld [vmem:[%s200 + $0x798] sm:$0xff]
        %v475 = vld [vmem:[%s200 + $0x7a0] sm:$0xff]
        %v476 = vld [vmem:[%s200 + $0x7a8] sm:$0xff]
        %v477 = vld [vmem:[%s200 + $0x7b0] sm:$0xff]
        %v478 = vld [vmem:[%s200 + $0x7b8] sm:$0xff]
        %v479 = vld [vmem:[%s200 + $0x7c0] sm:$0xff]
        %v480 = vld [vmem:[%s200 + $0x7c8] sm:$0xff]
        %v481 = vld [vmem:[%s200 + $0x7d0] sm:$0xff]
        %v482 = vld [vmem:[%s200 + $0x7d8] sm:$0xff]
        %v483 = vld [vmem:[%s200 + $0x7e0] sm:$0xff]
        %v484 = vld [vmem:[%s200 + $0x7e8] sm:$0xff]
        %v485 = vld [vmem:[%s200 + $0x7f0] sm:$0xff]
        %v486 = vld [vmem:[%s200 + $0x7f8] sm:$0xff]
        %v491 = vcombine.high %v227, %v227
        %v492 = vcombine.high %v228, %v228
        %v493 = vcombine.high %v229, %v229
        %v494 = vcombine.high %v230, %v230
        %499 = vmatprep.subr.mxu0 %v262
        %500 = vmatpush1.msra.mxu0 %v261
        %501 = vmatprep.subr.mxu0 %v260
        %502 = vmatpush1.msra.mxu0 %v259
        %503 = vmatprep.subr.mxu0 %v258
        %504 = vmatpush1.msra.mxu0 %v257
        %505 = vmatprep.subr.mxu0 %v256
        %506 = vmatpush1.msra.mxu0 %v255
        %507 = vmatprep.subr.mxu0 %v254
        %508 = vmatpush1.msra.mxu0 %v253
        %509 = vmatprep.subr.mxu0 %v252
        %510 = vmatpush1.msra.mxu0 %v251
        %511 = vmatprep.subr.mxu0 %v250
        %512 = vmatpush1.msra.mxu0 %v249
        %513 = vmatprep.subr.mxu0 %v248
        %514 = vmatpush1.msra.mxu0 %v247
        %515 = vmatprep.subr.mxu0 %v246
        %516 = vmatpush1.msra.mxu0 %v245
        %517 = vmatprep.subr.mxu0 %v244
        %518 = vmatpush1.msra.mxu0 %v243
        %519 = vmatprep.subr.mxu0 %v242
        %520 = vmatpush1.msra.mxu0 %v241
        %521 = vmatprep.subr.mxu0 %v240
        %522 = vmatpush1.msra.mxu0 %v239
        %523 = vmatprep.subr.mxu0 %v238
        %524 = vmatpush1.msra.mxu0 %v237
        %525 = vmatprep.subr.mxu0 %v236
        %526 = vmatpush1.msra.mxu0 %v235
        %527 = vmatprep.subr.mxu0 %v234
        %528 = vmatpush1.msra.mxu0 %v233
        %529 = vmatprep.subr.mxu0 %v232
        %530 = vmatpush1.msra.mxu0 %v231
        %531 = vmatprep.subr.mxu0 %v294
        %532 = vmatpush2.msra.mxu0 %v293
        %533 = vmatprep.subr.mxu0 %v292
        %534 = vmatpush2.msra.mxu0 %v291
        %535 = vmatprep.subr.mxu0 %v290
        %536 = vmatpush2.msra.mxu0 %v289
        %537 = vmatprep.subr.mxu0 %v288
        %538 = vmatpush2.msra.mxu0 %v287
        %539 = vmatprep.subr.mxu0 %v286
        %540 = vmatpush2.msra.mxu0 %v285
        %541 = vmatprep.subr.mxu0 %v284
        %542 = vmatpush2.msra.mxu0 %v283
        %543 = vmatprep.subr.mxu0 %v282
        %544 = vmatpush2.msra.mxu0 %v281
        %545 = vmatprep.subr.mxu0 %v280
        %546 = vmatpush2.msra.mxu0 %v279
        %547 = vmatprep.subr.mxu0 %v278
        %548 = vmatpush2.msra.mxu0 %v277
        %549 = vmatprep.subr.mxu0 %v276
        %550 = vmatpush2.msra.mxu0 %v275
        %551 = vmatprep.subr.mxu0 %v274
        %552 = vmatpush2.msra.mxu0 %v273
        %553 = vmatprep.subr.mxu0 %v272
        %554 = vmatpush2.msra.mxu0 %v271
        %555 = vmatprep.subr.mxu0 %v270
        %556 = vmatpush2.msra.mxu0 %v269
        %557 = vmatprep.subr.mxu0 %v268
        %558 = vmatpush2.msra.mxu0 %v267
        %559 = vmatprep.subr.mxu0 %v266
        %560 = vmatpush2.msra.mxu0 %v265
        %561 = vmatprep.subr.mxu0 %v264
        %562 = vmatpush2.msra.mxu0 %v263
        %563 = vmatprep.mubr.f32.mxu0 %v491
        %564 = vmatmul.mubr.f32.gmra.mxu0 %v227
        %v565 = vpop.f32.mrf.mxu0
        %v566 = vadd.f32 0.0, %v565
        %v567 = vpop.f32.mrf.mxu0
        %v568 = vadd.f32 0.0, %v567
        %569 = vdwg.mxu0
        %570 = vmatprep.subr.mxu0 %v326
        %571 = vmatpush1.msra.mxu0 %v325
        %572 = vmatprep.subr.mxu0 %v324
        %573 = vmatpush1.msra.mxu0 %v323
        %574 = vmatprep.subr.mxu0 %v322
        %575 = vmatpush1.msra.mxu0 %v321
        %576 = vmatprep.subr.mxu0 %v320
        %577 = vmatpush1.msra.mxu0 %v319
        %578 = vmatprep.subr.mxu0 %v318
        %579 = vmatpush1.msra.mxu0 %v317
        %580 = vmatprep.subr.mxu0 %v316
        %581 = vmatpush1.msra.mxu0 %v315
        %582 = vmatprep.subr.mxu0 %v314
        %583 = vmatpush1.msra.mxu0 %v313
        %584 = vmatprep.subr.mxu0 %v312
        %585 = vmatpush1.msra.mxu0 %v311
        %586 = vmatprep.subr.mxu0 %v310
        %587 = vmatpush1.msra.mxu0 %v309
        %588 = vmatprep.subr.mxu0 %v308
        %589 = vmatpush1.msra.mxu0 %v307
        %590 = vmatprep.subr.mxu0 %v306
        %591 = vmatpush1.msra.mxu0 %v305
        %592 = vmatprep.subr.mxu0 %v304
        %593 = vmatpush1.msra.mxu0 %v303
        %594 = vmatprep.subr.mxu0 %v302
        %595 = vmatpush1.msra.mxu0 %v301
        %596 = vmatprep.subr.mxu0 %v300
        %597 = vmatpush1.msra.mxu0 %v299
        %598 = vmatprep.subr.mxu0 %v298
        %599 = vmatpush1.msra.mxu0 %v297
        %600 = vmatprep.subr.mxu0 %v296
        %601 = vmatpush1.msra.mxu0 %v295
        %602 = vmatprep.subr.mxu0 %v358
        %603 = vmatpush2.msra.mxu0 %v357
        %604 = vmatprep.subr.mxu0 %v356
        %605 = vmatpush2.msra.mxu0 %v355
        %606 = vmatprep.subr.mxu0 %v354
        %607 = vmatpush2.msra.mxu0 %v353
        %608 = vmatprep.subr.mxu0 %v352
        %609 = vmatpush2.msra.mxu0 %v351
        %610 = vmatprep.subr.mxu0 %v350
        %611 = vmatpush2.msra.mxu0 %v349
        %612 = vmatprep.subr.mxu0 %v348
        %613 = vmatpush2.msra.mxu0 %v347
        %614 = vmatprep.subr.mxu0 %v346
        %615 = vmatpush2.msra.mxu0 %v345
        %616 = vmatprep.subr.mxu0 %v344
        %617 = vmatpush2.msra.mxu0 %v343
        %618 = vmatprep.subr.mxu0 %v342
        %619 = vmatpush2.msra.mxu0 %v341
        %620 = vmatprep.subr.mxu0 %v340
        %621 = vmatpush2.msra.mxu0 %v339
        %622 = vmatprep.subr.mxu0 %v338
        %623 = vmatpush2.msra.mxu0 %v337
        %624 = vmatprep.subr.mxu0 %v336
        %625 = vmatpush2.msra.mxu0 %v335
        %626 = vmatprep.subr.mxu0 %v334
        %627 = vmatpush2.msra.mxu0 %v333
        %628 = vmatprep.subr.mxu0 %v332
        %629 = vmatpush2.msra.mxu0 %v331
        %630 = vmatprep.subr.mxu0 %v330
        %631 = vmatpush2.msra.mxu0 %v329
        %632 = vmatprep.subr.mxu0 %v328
        %633 = vmatpush2.msra.mxu0 %v327
        %634 = vmatprep.mubr.f32.mxu0 %v492
        %635 = vmatmul.mubr.f32.gmra.mxu0 %v228
        %v636 = vpop.f32.mrf.mxu0
        %v637 = vadd.f32 %v566, %v636
        %v638 = vpop.f32.mrf.mxu0
        %v639 = vadd.f32 %v568, %v638
        %640 = vdwg.mxu0
        %641 = vmatprep.subr.mxu0 %v390
        %642 = vmatpush1.msra.mxu0 %v389
        %643 = vmatprep.subr.mxu0 %v388
        %644 = vmatpush1.msra.mxu0 %v387
        %645 = vmatprep.subr.mxu0 %v386
        %646 = vmatpush1.msra.mxu0 %v385
        %647 = vmatprep.subr.mxu0 %v384
        %648 = vmatpush1.msra.mxu0 %v383
        %649 = vmatprep.subr.mxu0 %v382
        %650 = vmatpush1.msra.mxu0 %v381
        %651 = vmatprep.subr.mxu0 %v380
        %652 = vmatpush1.msra.mxu0 %v379
        %653 = vmatprep.subr.mxu0 %v378
        %654 = vmatpush1.msra.mxu0 %v377
        %655 = vmatprep.subr.mxu0 %v376
        %656 = vmatpush1.msra.mxu0 %v375
        %657 = vmatprep.subr.mxu0 %v374
        %658 = vmatpush1.msra.mxu0 %v373
        %659 = vmatprep.subr.mxu0 %v372
        %660 = vmatpush1.msra.mxu0 %v371
        %661 = vmatprep.subr.mxu0 %v370
        %662 = vmatpush1.msra.mxu0 %v369
        %663 = vmatprep.subr.mxu0 %v368
        %664 = vmatpush1.msra.mxu0 %v367
        %665 = vmatprep.subr.mxu0 %v366
        %666 = vmatpush1.msra.mxu0 %v365
        %667 = vmatprep.subr.mxu0 %v364
        %668 = vmatpush1.msra.mxu0 %v363
        %669 = vmatprep.subr.mxu0 %v362
        %670 = vmatpush1.msra.mxu0 %v361
        %671 = vmatprep.subr.mxu0 %v360
        %672 = vmatpush1.msra.mxu0 %v359
        %673 = vmatprep.subr.mxu0 %v422
        %674 = vmatpush2.msra.mxu0 %v421
        %675 = vmatprep.subr.mxu0 %v420
        %676 = vmatpush2.msra.mxu0 %v419
        %677 = vmatprep.subr.mxu0 %v418
        %678 = vmatpush2.msra.mxu0 %v417
        %679 = vmatprep.subr.mxu0 %v416
        %680 = vmatpush2.msra.mxu0 %v415
        %681 = vmatprep.subr.mxu0 %v414
        %682 = vmatpush2.msra.mxu0 %v413
        %683 = vmatprep.subr.mxu0 %v412
        %684 = vmatpush2.msra.mxu0 %v411
        %685 = vmatprep.subr.mxu0 %v410
        %686 = vmatpush2.msra.mxu0 %v409
        %687 = vmatprep.subr.mxu0 %v408
        %688 = vmatpush2.msra.mxu0 %v407
        %689 = vmatprep.subr.mxu0 %v406
        %690 = vmatpush2.msra.mxu0 %v405
        %691 = vmatprep.subr.mxu0 %v404
        %692 = vmatpush2.msra.mxu0 %v403
        %693 = vmatprep.subr.mxu0 %v402
        %694 = vmatpush2.msra.mxu0 %v401
        %695 = vmatprep.subr.mxu0 %v400
        %696 = vmatpush2.msra.mxu0 %v399
        %697 = vmatprep.subr.mxu0 %v398
        %698 = vmatpush2.msra.mxu0 %v397
        %699 = vmatprep.subr.mxu0 %v396
        %700 = vmatpush2.msra.mxu0 %v395
        %701 = vmatprep.subr.mxu0 %v394
        %702 = vmatpush2.msra.mxu0 %v393
        %703 = vmatprep.subr.mxu0 %v392
        %704 = vmatpush2.msra.mxu0 %v391
        %705 = vmatprep.mubr.f32.mxu0 %v493
        %706 = vmatmul.mubr.f32.gmra.mxu0 %v229
        %v707 = vpop.f32.mrf.mxu0
        %v708 = vadd.f32 %v637, %v707
        %v709 = vpop.f32.mrf.mxu0
        %v710 = vadd.f32 %v639, %v709
        %711 = vdwg.mxu0
        %712 = vmatprep.subr.mxu0 %v454
        %713 = vmatpush1.msra.mxu0 %v453
        %714 = vmatprep.subr.mxu0 %v452
        %715 = vmatpush1.msra.mxu0 %v451
        %716 = vmatprep.subr.mxu0 %v450
        %717 = vmatpush1.msra.mxu0 %v449
        %718 = vmatprep.subr.mxu0 %v448
        %719 = vmatpush1.msra.mxu0 %v447
        %720 = vmatprep.subr.mxu0 %v446
        %721 = vmatpush1.msra.mxu0 %v445
        %722 = vmatprep.subr.mxu0 %v444
        %723 = vmatpush1.msra.mxu0 %v443
        %724 = vmatprep.subr.mxu0 %v442
        %725 = vmatpush1.msra.mxu0 %v441
        %726 = vmatprep.subr.mxu0 %v440
        %727 = vmatpush1.msra.mxu0 %v439
        %728 = vmatprep.subr.mxu0 %v438
        %729 = vmatpush1.msra.mxu0 %v437
        %730 = vmatprep.subr.mxu0 %v436
        %731 = vmatpush1.msra.mxu0 %v435
        %732 = vmatprep.subr.mxu0 %v434
        %733 = vmatpush1.msra.mxu0 %v433
        %734 = vmatprep.subr.mxu0 %v432
        %735 = vmatpush1.msra.mxu0 %v431
        %736 = vmatprep.subr.mxu0 %v430
        %737 = vmatpush1.msra.mxu0 %v429
        %738 = vmatprep.subr.mxu0 %v428
        %739 = vmatpush1.msra.mxu0 %v427
        %740 = vmatprep.subr.mxu0 %v426
        %741 = vmatpush1.msra.mxu0 %v425
        %742 = vmatprep.subr.mxu0 %v424
        %743 = vmatpush1.msra.mxu0 %v423
        %744 = vmatprep.subr.mxu0 %v486
        %745 = vmatpush2.msra.mxu0 %v485
        %746 = vmatprep.subr.mxu0 %v484
        %747 = vmatpush2.msra.mxu0 %v483
        %748 = vmatprep.subr.mxu0 %v482
        %749 = vmatpush2.msra.mxu0 %v481
        %750 = vmatprep.subr.mxu0 %v480
        %751 = vmatpush2.msra.mxu0 %v479
        %752 = vmatprep.subr.mxu0 %v478
        %753 = vmatpush2.msra.mxu0 %v477
        %754 = vmatprep.subr.mxu0 %v476
        %755 = vmatpush2.msra.mxu0 %v475
        %756 = vmatprep.subr.mxu0 %v474
        %757 = vmatpush2.msra.mxu0 %v473
        %758 = vmatprep.subr.mxu0 %v472
        %759 = vmatpush2.msra.mxu0 %v471
        %760 = vmatprep.subr.mxu0 %v470
        %761 = vmatpush2.msra.mxu0 %v469
        %762 = vmatprep.subr.mxu0 %v468
        %763 = vmatpush2.msra.mxu0 %v467
        %764 = vmatprep.subr.mxu0 %v466
        %765 = vmatpush2.msra.mxu0 %v465
        %766 = vmatprep.subr.mxu0 %v464
        %767 = vmatpush2.msra.mxu0 %v463
        %768 = vmatprep.subr.mxu0 %v462
        %769 = vmatpush2.msra.mxu0 %v461
        %770 = vmatprep.subr.mxu0 %v460
        %771 = vmatpush2.msra.mxu0 %v459
        %772 = vmatprep.subr.mxu0 %v458
        %773 = vmatpush2.msra.mxu0 %v457
        %774 = vmatprep.subr.mxu0 %v456
        %775 = vmatpush2.msra.mxu0 %v455
        %776 = vmatprep.mubr.f32.mxu0 %v494
        %777 = vmatmul.mubr.f32.gmra.mxu0 %v230
        %v778 = vpop.f32.mrf.mxu0
        %v779 = vadd.f32 %v708, %v778
        %v780 = vpop.f32.mrf.mxu0
        %v781 = vadd.f32 %v710, %v780
        %782 = vdwg.mxu0
        %v785 = vcombine.low %v779, %v781
        %787 = vst [vmem:[%s225] sm:$0xff] %v785
        %s788 = sand.u32 %s105, 1
        %s789 = scalar_lea.sflag [#allocation6], %s788
        %s790 = sand.u32 %s105, 1
        %s791 = smul.addr %s790, 8
        %s792 = scalar_lea.vmem [#allocation9], %s791
        // Predicated region
        $region37: #{tpu_custom_call.1} parent=27 // pred_check
          %p793 = pneg %p115
        $region38: #{tpu_custom_call.1} parent=27 // pred_check_branch
          %795 = sbr.rel (%p793) target = $region40
        $region39: #{tpu_custom_call.1} parent=27 // pred_region
          %s797 = ssub.s32 128, 128
          %798 = vsyncadd %s789, %s797
          %s799 = smul.addr %s31, 2
          %s800 = smul.addr %s32, 2
          %s801 = sadd.s32 %s799, %s800
          %s802 = smul.addr %s801, 64
          %s803 = scalar_lea.hbm %s3, %s802
          %s805 = sshll.u32 %s792, 4
          %s806 = int_to_ptr.vmem [resolvable:$true] %s805
          %808 = dma.vmem_to_hbm [thread:$0]  %s806, 128, %s803, %s789
        $region40: #{tpu_custom_call.1} parent=27 // pred_fallthru
          _
      $region28: #{tpu_custom_call.1} parent=5 // pred_fallthru
        _
      %p809 = scmp.le.s32.totalorder 2, %s22
      // Predicated region
      $region41: #{tpu_custom_call.1} parent=5 // pred_check
        %p810 = pneg %p809
      $region42: #{tpu_custom_call.1} parent=5 // pred_check_branch
        %812 = sbr.rel (%p810) target = $region44
      $region43: #{tpu_custom_call.1} parent=5 // pred_region
        %s813 = ssub.s32 %s22, 2
        // Predicated region
        $region45: #{tpu_custom_call.1} parent=43 // pred_check
          %p814 = pneg %p121
        $region46: #{tpu_custom_call.1} parent=43 // pred_check_branch
          %816 = sbr.rel (%p814) target = $region48
        $region47: #{tpu_custom_call.1} parent=43 // pred_region
          %s817 = sand.u32 %s106, 1
          %s818 = scalar_lea.sflag [#allocation6], %s817
          %s819 = sand.u32 %s106, 1
          %s820 = smul.addr %s819, 8
          %s821 = scalar_lea.vmem [#allocation9], %s820
          %822 = dma.done %s818, 128
        $region48: #{tpu_custom_call.1} parent=43 // pred_fallthru
          _
      $region44: #{tpu_custom_call.1} parent=5 // pred_fallthru
        _
    $region6: #{tpu_custom_call.1} parent=1 // loop_footer
      %s26 = sadd.s32 1, %s22
    $region7: #{tpu_custom_call.1} parent=1 // loop_footer_branch
      %21 = sbr.rel target = $region3
    $region8: #{tpu_custom_call.1} parent=1 // loop_exit
      _
    %823 = vsyncpa [#allocation5], 1
    %s824 = scalar_lea.sflag [#allocation5], 1
    %825 = vsyncpa %s824, 1
    %826 = vsyncpa [#allocation8], 1
    %s827 = scalar_lea.sflag [#allocation8], 1
    %828 = vsyncpa %s827, 1
    %829 = vsyncpa [#allocation6], 1
    %s830 = scalar_lea.sflag [#allocation6], 1
    %831 = vsyncpa %s830, 1

</llo_original>
